<compile_context>
chip_gen: v6e
topology: v6e:2x2x1
jax: 0.10.0
libtpu: 0.0.40
codegen_flags: <defaults>
</compile_context>

<pallas_src>
import jax
import jax.numpy as jnp
from jax import lax
from jax.experimental import pallas as pl
from jax.experimental.pallas import tpu as pltpu


def _round_up(x, m):
    return (x + m - 1) // m * m


# ---------------------------------------------------------------------------
# Prologue kernel: mean_bases[c, :] = bases[c, :, :].mean(axis=0)
# Tiled over the class axis -> bases tiles are double-buffered HBM->VMEM.
# ---------------------------------------------------------------------------
def _bases_mean_kernel(bases_ref, out_ref):
    t = bases_ref[...].astype(jnp.float32)            # (TC, A, D)
    out_ref[...] = jnp.mean(t, axis=1).astype(out_ref.dtype)


def _bases_mean(bases, out_dtype, *, tile_bytes=4 << 20):
    C, A, D = bases.shape
    per_class = A * D * bases.dtype.itemsize
    tc = max(1, min(C, tile_bytes // max(per_class, 1)))
    if tc < C:
        # keep the sublane dim of the (tc, D) output block 8-aligned
        tc = max(8, (tc // 8) * 8)
    return pl.pallas_call(
        _bases_mean_kernel,
        out_shape=jax.ShapeDtypeStruct((C, D), out_dtype),
        grid=(pl.cdiv(C, tc),),
        in_specs=[pl.BlockSpec((tc, A, D), lambda j: (j, 0, 0))],
        out_specs=pl.BlockSpec((tc, D), lambda j: (j, 0)),
        compiler_params=pltpu.CompilerParams(
            dimension_semantics=("parallel",),
            vmem_limit_bytes=32 * 1024 * 1024,
        ),
    )(bases)


# ---------------------------------------------------------------------------
# Main kernel: fused fc + L2-normalize + mean-bases matmul.
#   out[b, c] = normalize(x[b] @ W^T + bias) @ mean_bases[c]^T - 1
# Grid is (batch tiles, class tiles); both axes independent -> "parallel"
# (shards across v7x's 2 TensorCores).
# ---------------------------------------------------------------------------
def _classifier_kernel(x_ref, w_ref, b_ref, mb_ref, out_ref):
    # fc: x @ W^T + b  (MXU, f32 accumulation)
    xp = lax.dot_general(
        x_ref[...], w_ref[...], (((1,), (1,)), ((), ())),
        preferred_element_type=jnp.float32,
    ) + b_ref[...].astype(jnp.float32)                          # (TB, S)

    # F.normalize(dim=-1): x / max(||x||, 1e-12) == x * rsqrt(max(||x||^2, 1e-24))
    # rsqrt goes to the EUP slot (free alongside VPU/MXU work).
    sumsq = jnp.sum(xp * xp, axis=-1, keepdims=True)            # (TB, 1)
    xpn = xp * lax.rsqrt(jnp.maximum(sumsq, 1e-24))

    # scores = mean_a(sim) - 1 = x_proj @ mean_bases^T - 1  (single MXU matmul)
    sim_mean = lax.dot_general(
        xpn.astype(mb_ref.dtype), mb_ref[...], (((1,), (1,)), ((), ())),
        preferred_element_type=jnp.float32,
    )                                                           # (TB, TC)
    out_ref[...] = (sim_mean - 1.0).astype(out_ref.dtype)


def adaptive_subspace_classifier(x, fc_w, fc_b, bases, *, compute_dtype=jnp.float32):
    # compute_dtype=jnp.bfloat16 halves HBM traffic / doubles MXU throughput
    # (accumulation stays f32); default f32 matches torch numerics exactly.
    B, D = x.shape
    S, D_w = fc_w.shape
    C, A, D_b = bases.shape
    assert D_w == D and D_b == D and S == D, (
        "einsum 'bd,cad->bca' requires subspace_dim == input_dim"
    )

    # Prologue (Pallas): mean over the subspace axis -> (C, D)
    mean_bases = _bases_mean(bases, compute_dtype)

    # Lane-dense output: pad class dim to a multiple of 128 (256 when larger),
    # so stores are full-width vst instead of masked vst.msk.
    tc = 128 if C <= 128 else 256
    c_pad = _round_up(C, tc)
    if c_pad != C:
        mean_bases = jnp.pad(mean_bases, ((0, c_pad - C), (0, 0)))

    # Batch tiling (full batch for small B, 256-row MXU-sized tiles otherwise).
    tb = B if B <= 256 else 256
    b_pad = _round_up(B, tb)
    x_in = x.astype(compute_dtype)
    if b_pad != B:
        x_in = jnp.pad(x_in, ((0, b_pad - B), (0, 0)))

    w_in = fc_w.astype(compute_dtype)
    bias2d = fc_b.reshape(1, S).astype(jnp.float32)

    grid = (b_pad // tb, c_pad // tc)
    out = pl.pallas_call(
        _classifier_kernel,
        out_shape=jax.ShapeDtypeStruct((b_pad, c_pad), jnp.float32),
        grid=grid,
        in_specs=[
            pl.BlockSpec((tb, D), lambda i, j: (i, 0)),
            pl.BlockSpec((S, D), lambda i, j: (0, 0)),
            pl.BlockSpec((1, S), lambda i, j: (0, 0)),
            pl.BlockSpec((tc, D), lambda i, j: (j, 0)),
        ],
        out_specs=pl.BlockSpec((tb, tc), lambda i, j: (i, j)),
        compiler_params=pltpu.CompilerParams(
            dimension_semantics=("parallel", "parallel"),
            vmem_limit_bytes=32 * 1024 * 1024,
        ),
    )(x_in, w_in, bias2d, mean_bases)

    return out[:B, :C]


def _reference(x, fc_w, fc_b, bases):
    # Pure-JAX reference mirroring the PyTorch forward.
    xp = x @ fc_w.T + fc_b
    n = jnp.sqrt(jnp.sum(xp * xp, axis=-1, keepdims=True))
    xp = xp / jnp.maximum(n, 1e-12)
    sim = jnp.einsum("bd,cad->bca", xp, bases)
    return -(1.0 - sim).mean(-1)


if __name__ == "__main__":
    # Small, lane-friendly shapes. input_dim must equal subspace_dim for the
    # module's einsum to be well-formed.
    batch = 8
    input_dim = 128
    subspace_dim = 128
    num_classes = 8

    key = jax.random.PRNGKey(0)
    kx, kb, kw, kbias = jax.random.split(key, 4)

    x = jax.random.normal(kx, (batch, input_dim), dtype=jnp.float32)
    bases = jax.random.normal(
        kb, (num_classes, subspace_dim, input_dim), dtype=jnp.float32
    )
    bound = 1.0 / jnp.sqrt(jnp.float32(input_dim))
    fc_w = jax.random.uniform(
        kw, (subspace_dim, input_dim), minval=-bound, maxval=bound, dtype=jnp.float32
    )
    fc_b = jax.random.uniform(
        kbias, (subspace_dim,), minval=-bound, maxval=bound, dtype=jnp.float32
    )

    scores = adaptive_subspace_classifier(x, fc_w, fc_b, bases)
    scores = jax.block_until_ready(scores)

    ref = _reference(x, fc_w, fc_b, bases)
    assert scores.shape == (batch, num_classes)
    assert jnp.allclose(scores, ref, atol=2e-4, rtol=2e-4), "mismatch vs reference"

    print("KERNEL_OK")
</pallas_src>

<mosaic_0001>
module attributes {stable_mosaic.version = 11 : i64} {
  func.func @_bases_mean_kernel(%arg0: i32, %arg1: memref<8x128x128xf32, #tpu.memory_space<vmem>>, %arg2: memref<8x128xf32, #tpu.memory_space<vmem>>) attributes {dimension_semantics = [#tpu.dimension_semantics<parallel>], iteration_bounds = array<i64: 1>, scalar_prefetch = 0 : i64, scratch_operands = 0 : i64, tpu.core_type = #tpu.core_type<tc>, window_params = [{transform_indices = @transform_0, window_bounds = array<i64: 8, 128, 128>}, {transform_indices = @transform_1, window_bounds = array<i64: 8, 128>}]} {
    %c0 = arith.constant 0 : index
    %c0_0 = arith.constant 0 : index
    %c0_1 = arith.constant 0 : index
    %0 = vector.load %arg1[%c0, %c0_0, %c0_1] : memref<8x128x128xf32, #tpu.memory_space<vmem>>, vector<8x128x128xf32>
    %cst = arith.constant dense<0.000000e+00> : vector<8x128xf32>
    %1 = vector.multi_reduction <add>, %0, %cst [1] : vector<8x128x128xf32> to vector<8x128xf32>
    %cst_2 = arith.constant 1.280000e+02 : f32
    %2 = vector.broadcast %cst_2 : f32 to vector<8x128xf32>
    %3 = arith.divf %1, %2 : vector<8x128xf32>
    %c0_3 = arith.constant 0 : index
    %c0_4 = arith.constant 0 : index
    %4 = vector.load %arg2[%c0_3, %c0_4] : memref<8x128xf32, #tpu.memory_space<vmem>>, vector<8x128xf32>
    tpu.vector_store %arg2[%c0_3, %c0_4], %3 {strides = array<i32>} : memref<8x128xf32, #tpu.memory_space<vmem>>, vector<8x128xf32>,
    return
  }
  func.func @transform_0(%arg0: i32) -> (i32, i32, i32) {
    %c0_i32 = arith.constant 0 : i32
    %c0_i32_0 = arith.constant 0 : i32
    %c0_i32_1 = arith.constant 0 : i32
    return %arg0, %c0_i32, %c0_i32_0 : i32, i32, i32
  }
  func.func @transform_1(%arg0: i32) -> (i32, i32) {
    %c0_i32 = arith.constant 0 : i32
    %c0_i32_0 = arith.constant 0 : i32
    return %arg0, %c0_i32 : i32, i32
  }
}

</mosaic_0001>

<llo_original>
// kernel: tpu_custom_call.1
$region0: #{tpu_custom_call.1}
  #allocation0 [shape = 'u32[]', space=smem, size = 0x4, offset = 0x4, fixed_abs, tag = 'smem constant byte address 0x4 - core index']
  #allocation1 [shape = 'u32[144,128]{1,0:T(1,128)}', space=vmem, size = 0x12000, scoped, tag = 'internal scratch']
  %s0 = inlined_call_operand.hbm [shape: f32[8,128,128], index: 0, kind: input, shape index: {}]
  %s1 = inlined_call_operand.hbm [shape: f32[8,128], index: 1, kind: output, shape index: {}]
  %s2 = sld [smem:[#allocation0]]
  $region18: #{tpu_custom_call.1} parent=0
    _
  %s4 = ssub.s32 1, %s2
  %s5 = scalar_select 0, %s4, %s2
  $region1: #{tpu_custom_call.1} parent=0
    #allocation2 [shape = 'u8[524288]{0}', space=vmem, size = 0x80000, scoped, tag = 'input window, operand 0, single buffered']
    #allocation3 [shape = 's32[1]{0}', space=sflag, size = 0x4, scoped, tag = 'scoped memory for tpu_custom_call.1']
    #allocation4 [shape = 's32[1]{0}', space=sflag, size = 0x4, scoped, tag = 'scoped memory for tpu_custom_call.1']
    #allocation5 [shape = 'u8[4096]{0}', space=vmem, size = 0x1000, scoped, tag = 'output window, operand 0, single buffered']
    %6 = vsyncpa [#allocation3], 0
    %7 = vsyncpa [#allocation4], 0
    // Predicated region
    $region2: #{tpu_custom_call.1} parent=1 // pred_check
      _
    $region3: #{tpu_custom_call.1} parent=1 // pred_check_branch
      %9 = sbr.rel (0) target = $region5
    $region4: #{tpu_custom_call.1} parent=1 // pred_region
      %s11 = ssub.s32 16384, 16384
      %12 = vsyncadd [#allocation3], %s11
      %s13 = sshll.u32 [#allocation2], 4
      %s14 = int_to_ptr.vmem [resolvable:$true] %s13
      %19 = dma.hbm_to_vmem [thread:$0]  %s0, 16384, %s14, [#allocation3], 128, 128, 8
    $region5: #{tpu_custom_call.1} parent=1 // pred_fallthru
      _
    // Predicated region
    $region6: #{tpu_custom_call.1} parent=1 // pred_check
      _
    $region7: #{tpu_custom_call.1} parent=1 // pred_check_branch
      %21 = sbr.rel (0) target = $region9
    $region8: #{tpu_custom_call.1} parent=1 // pred_region
      %22 = dma.done [#allocation3], 16384
    $region9: #{tpu_custom_call.1} parent=1 // pred_fallthru
      _
    %v23 = vld [vmem:[#allocation2] sm:$0xff]
    %v24 = vld [vmem:[#allocation2 + $0x8] sm:$0xff]
    %v25 = vld [vmem:[#allocation2 + $0x10] sm:$0xff]
    %v26 = vld [vmem:[#allocation2 + $0x18] sm:$0xff]
    %v27 = vld [vmem:[#allocation2 + $0x20] sm:$0xff]
    %v28 = vld [vmem:[#allocation2 + $0x28] sm:$0xff]
    %v29 = vld [vmem:[#allocation2 + $0x30] sm:$0xff]
    %v30 = vld [vmem:[#allocation2 + $0x38] sm:$0xff]
    %v31 = vld [vmem:[#allocation2 + $0x40] sm:$0xff]
    %v32 = vld [vmem:[#allocation2 + $0x48] sm:$0xff]
    %v33 = vld [vmem:[#allocation2 + $0x50] sm:$0xff]
    %v34 = vld [vmem:[#allocation2 + $0x58] sm:$0xff]
    %v35 = vld [vmem:[#allocation2 + $0x60] sm:$0xff]
    %v36 = vld [vmem:[#allocation2 + $0x68] sm:$0xff]
    %v37 = vld [vmem:[#allocation2 + $0x70] sm:$0xff]
    %v38 = vld [vmem:[#allocation2 + $0x78] sm:$0xff]
    %v39 = vld [vmem:[#allocation2 + $0x80] sm:$0xff]
    %v40 = vld [vmem:[#allocation2 + $0x88] sm:$0xff]
    %v41 = vld [vmem:[#allocation2 + $0x90] sm:$0xff]
    %v42 = vld [vmem:[#allocation2 + $0x98] sm:$0xff]
    %v43 = vld [vmem:[#allocation2 + $0xa0] sm:$0xff]
    %v44 = vld [vmem:[#allocation2 + $0xa8] sm:$0xff]
    %v45 = vld [vmem:[#allocation2 + $0xb0] sm:$0xff]
    %v46 = vld [vmem:[#allocation2 + $0xb8] sm:$0xff]
    %v47 = vld [vmem:[#allocation2 + $0xc0] sm:$0xff]
    %v48 = vld [vmem:[#allocation2 + $0xc8] sm:$0xff]
    %v49 = vld [vmem:[#allocation2 + $0xd0] sm:$0xff]
    %v50 = vld [vmem:[#allocation2 + $0xd8] sm:$0xff]
    %v51 = vld [vmem:[#allocation2 + $0xe0] sm:$0xff]
    %v52 = vld [vmem:[#allocation2 + $0xe8] sm:$0xff]
    %v53 = vld [vmem:[#allocation2 + $0xf0] sm:$0xff]
    %v54 = vld [vmem:[#allocation2 + $0xf8] sm:$0xff]
    %v55 = vld [vmem:[#allocation2 + $0x100] sm:$0xff]
    %v56 = vld [vmem:[#allocation2 + $0x108] sm:$0xff]
    %v57 = vld [vmem:[#allocation2 + $0x110] sm:$0xff]
    %v58 = vld [vmem:[#allocation2 + $0x118] sm:$0xff]
    %v59 = vld [vmem:[#allocation2 + $0x120] sm:$0xff]
    %v60 = vld [vmem:[#allocation2 + $0x128] sm:$0xff]
    %v61 = vld [vmem:[#allocation2 + $0x130] sm:$0xff]
    %v62 = vld [vmem:[#allocation2 + $0x138] sm:$0xff]
    %v63 = vld [vmem:[#allocation2 + $0x140] sm:$0xff]
    %v64 = vld [vmem:[#allocation2 + $0x148] sm:$0xff]
    %v65 = vld [vmem:[#allocation2 + $0x150] sm:$0xff]
    %v66 = vld [vmem:[#allocation2 + $0x158] sm:$0xff]
    %v67 = vld [vmem:[#allocation2 + $0x160] sm:$0xff]
    %v68 = vld [vmem:[#allocation2 + $0x168] sm:$0xff]
    %v69 = vld [vmem:[#allocation2 + $0x170] sm:$0xff]
    %v70 = vld [vmem:[#allocation2 + $0x178] sm:$0xff]
    %v71 = vld [vmem:[#allocation2 + $0x180] sm:$0xff]
    %v72 = vld [vmem:[#allocation2 + $0x188] sm:$0xff]
    %v73 = vld [vmem:[#allocation2 + $0x190] sm:$0xff]
    %v74 = vld [vmem:[#allocation2 + $0x198] sm:$0xff]
    %v75 = vld [vmem:[#allocation2 + $0x1a0] sm:$0xff]
    %v76 = vld [vmem:[#allocation2 + $0x1a8] sm:$0xff]
    %v77 = vld [vmem:[#allocation2 + $0x1b0] sm:$0xff]
    %v78 = vld [vmem:[#allocation2 + $0x1b8] sm:$0xff]
    %v79 = vld [vmem:[#allocation2 + $0x1c0] sm:$0xff]
    %v80 = vld [vmem:[#allocation2 + $0x1c8] sm:$0xff]
    %v81 = vld [vmem:[#allocation2 + $0x1d0] sm:$0xff]
    %v82 = vld [vmem:[#allocation2 + $0x1d8] sm:$0xff]
    %v83 = vld [vmem:[#allocation2 + $0x1e0] sm:$0xff]
    %v84 = vld [vmem:[#allocation2 + $0x1e8] sm:$0xff]
    %v85 = vld [vmem:[#allocation2 + $0x1f0] sm:$0xff]
    %v86 = vld [vmem:[#allocation2 + $0x1f8] sm:$0xff]
    %v87 = vld [vmem:[#allocation2 + $0x200] sm:$0xff]
    %v88 = vld [vmem:[#allocation2 + $0x208] sm:$0xff]
    %v89 = vld [vmem:[#allocation2 + $0x210] sm:$0xff]
    %v90 = vld [vmem:[#allocation2 + $0x218] sm:$0xff]
    %v91 = vld [vmem:[#allocation2 + $0x220] sm:$0xff]
    %v92 = vld [vmem:[#allocation2 + $0x228] sm:$0xff]
    %v93 = vld [vmem:[#allocation2 + $0x230] sm:$0xff]
    %v94 = vld [vmem:[#allocation2 + $0x238] sm:$0xff]
    %v95 = vld [vmem:[#allocation2 + $0x240] sm:$0xff]
    %v96 = vld [vmem:[#allocation2 + $0x248] sm:$0xff]
    %v97 = vld [vmem:[#allocation2 + $0x250] sm:$0xff]
    %v98 = vld [vmem:[#allocation2 + $0x258] sm:$0xff]
    %v99 = vld [vmem:[#allocation2 + $0x260] sm:$0xff]
    %v100 = vld [vmem:[#allocation2 + $0x268] sm:$0xff]
    %v101 = vld [vmem:[#allocation2 + $0x270] sm:$0xff]
    %v102 = vld [vmem:[#allocation2 + $0x278] sm:$0xff]
    %v103 = vld [vmem:[#allocation2 + $0x280] sm:$0xff]
    %v104 = vld [vmem:[#allocation2 + $0x288] sm:$0xff]
    %v105 = vld [vmem:[#allocation2 + $0x290] sm:$0xff]
    %v106 = vld [vmem:[#allocation2 + $0x298] sm:$0xff]
    %v107 = vld [vmem:[#allocation2 + $0x2a0] sm:$0xff]
    %v108 = vld [vmem:[#allocation2 + $0x2a8] sm:$0xff]
    %v109 = vld [vmem:[#allocation2 + $0x2b0] sm:$0xff]
    %v110 = vld [vmem:[#allocation2 + $0x2b8] sm:$0xff]
    %v111 = vld [vmem:[#allocation2 + $0x2c0] sm:$0xff]
    %v112 = vld [vmem:[#allocation2 + $0x2c8] sm:$0xff]
    %v113 = vld [vmem:[#allocation2 + $0x2d0] sm:$0xff]
    %v114 = vld [vmem:[#allocation2 + $0x2d8] sm:$0xff]
    %v115 = vld [vmem:[#allocation2 + $0x2e0] sm:$0xff]
    %v116 = vld [vmem:[#allocation2 + $0x2e8] sm:$0xff]
    %v117 = vld [vmem:[#allocation2 + $0x2f0] sm:$0xff]
    %v118 = vld [vmem:[#allocation2 + $0x2f8] sm:$0xff]
    %v119 = vld [vmem:[#allocation2 + $0x300] sm:$0xff]
    %v120 = vld [vmem:[#allocation2 + $0x308] sm:$0xff]
    %v121 = vld [vmem:[#allocation2 + $0x310] sm:$0xff]
    %v122 = vld [vmem:[#allocation2 + $0x318] sm:$0xff]
    %v123 = vld [vmem:[#allocation2 + $0x320] sm:$0xff]
    %v124 = vld [vmem:[#allocation2 + $0x328] sm:$0xff]
    %v125 = vld [vmem:[#allocation2 + $0x330] sm:$0xff]
    %v126 = vld [vmem:[#allocation2 + $0x338] sm:$0xff]
    %v127 = vld [vmem:[#allocation2 + $0x340] sm:$0xff]
    %v128 = vld [vmem:[#allocation2 + $0x348] sm:$0xff]
    %v129 = vld [vmem:[#allocation2 + $0x350] sm:$0xff]
    %v130 = vld [vmem:[#allocation2 + $0x358] sm:$0xff]
    %v131 = vld [vmem:[#allocation2 + $0x360] sm:$0xff]
    %v132 = vld [vmem:[#allocation2 + $0x368] sm:$0xff]
    %v133 = vld [vmem:[#allocation2 + $0x370] sm:$0xff]
    %v134 = vld [vmem:[#allocation2 + $0x378] sm:$0xff]
    %v135 = vld [vmem:[#allocation2 + $0x380] sm:$0xff]
    %v136 = vld [vmem:[#allocation2 + $0x388] sm:$0xff]
    %v137 = vld [vmem:[#allocation2 + $0x390] sm:$0xff]
    %v138 = vld [vmem:[#allocation2 + $0x398] sm:$0xff]
    %v139 = vld [vmem:[#allocation2 + $0x3a0] sm:$0xff]
    %v140 = vld [vmem:[#allocation2 + $0x3a8] sm:$0xff]
    %v141 = vld [vmem:[#allocation2 + $0x3b0] sm:$0xff]
    %v142 = vld [vmem:[#allocation2 + $0x3b8] sm:$0xff]
    %v143 = vld [vmem:[#allocation2 + $0x3c0] sm:$0xff]
    %v144 = vld [vmem:[#allocation2 + $0x3c8] sm:$0xff]
    %v145 = vld [vmem:[#allocation2 + $0x3d0] sm:$0xff]
    %v146 = vld [vmem:[#allocation2 + $0x3d8] sm:$0xff]
    %v147 = vld [vmem:[#allocation2 + $0x3e0] sm:$0xff]
    %v148 = vld [vmem:[#allocation2 + $0x3e8] sm:$0xff]
    %v149 = vld [vmem:[#allocation2 + $0x3f0] sm:$0xff]
    %v150 = vld [vmem:[#allocation2 + $0x3f8] sm:$0xff]
    %v151 = vadd.f32 %v23, %v24
    %v152 = vadd.f32 %v151, %v25
    %v153 = vadd.f32 %v152, %v26
    %v154 = vadd.f32 %v153, %v27
    %v155 = vadd.f32 %v154, %v28
    %v156 = vadd.f32 %v155, %v29
    %v157 = vadd.f32 %v156, %v30
    %v158 = vadd.f32 %v157, %v31
    %v159 = vadd.f32 %v158, %v32
    %v160 = vadd.f32 %v159, %v33
    %v161 = vadd.f32 %v160, %v34
    %v162 = vadd.f32 %v161, %v35
    %v163 = vadd.f32 %v162, %v36
    %v164 = vadd.f32 %v163, %v37
    %v165 = vadd.f32 %v164, %v38
    %v166 = vrot.slane %v165, 4
    %v167 = vadd.f32 %v165, %v166
    %v168 = vrot.slane %v167, 2
    %v169 = vadd.f32 %v167, %v168
    %v170 = vrot.slane %v169, 1
    %v171 = vadd.f32 %v169, %v170
    %v172 = vadd.f32 %v39, %v40
    %v173 = vadd.f32 %v172, %v41
    %v174 = vadd.f32 %v173, %v42
    %v175 = vadd.f32 %v174, %v43
    %v176 = vadd.f32 %v175, %v44
    %v177 = vadd.f32 %v176, %v45
    %v178 = vadd.f32 %v177, %v46
    %v179 = vadd.f32 %v178, %v47
    %v180 = vadd.f32 %v179, %v48
    %v181 = vadd.f32 %v180, %v49
    %v182 = vadd.f32 %v181, %v50
    %v183 = vadd.f32 %v182, %v51
    %v184 = vadd.f32 %v183, %v52
    %v185 = vadd.f32 %v184, %v53
    %v186 = vadd.f32 %v185, %v54
    %v187 = vrot.slane %v186, 4
    %v188 = vadd.f32 %v186, %v187
    %v189 = vrot.slane %v188, 2
    %v190 = vadd.f32 %v188, %v189
    %v191 = vrot.slane %v190, 1
    %v192 = vadd.f32 %v190, %v191
    %v193 = vadd.f32 %v55, %v56
    %v194 = vadd.f32 %v193, %v57
    %v195 = vadd.f32 %v194, %v58
    %v196 = vadd.f32 %v195, %v59
    %v197 = vadd.f32 %v196, %v60
    %v198 = vadd.f32 %v197, %v61
    %v199 = vadd.f32 %v198, %v62
    %v200 = vadd.f32 %v199, %v63
    %v201 = vadd.f32 %v200, %v64
    %v202 = vadd.f32 %v201, %v65
    %v203 = vadd.f32 %v202, %v66
    %v204 = vadd.f32 %v203, %v67
    %v205 = vadd.f32 %v204, %v68
    %v206 = vadd.f32 %v205, %v69
    %v207 = vadd.f32 %v206, %v70
    %v208 = vrot.slane %v207, 4
    %v209 = vadd.f32 %v207, %v208
    %v210 = vrot.slane %v209, 2
    %v211 = vadd.f32 %v209, %v210
    %v212 = vrot.slane %v211, 1
    %v213 = vadd.f32 %v211, %v212
    %v214 = vadd.f32 %v71, %v72
    %v215 = vadd.f32 %v214, %v73
    %v216 = vadd.f32 %v215, %v74
    %v217 = vadd.f32 %v216, %v75
    %v218 = vadd.f32 %v217, %v76
    %v219 = vadd.f32 %v218, %v77
    %v220 = vadd.f32 %v219, %v78
    %v221 = vadd.f32 %v220, %v79
    %v222 = vadd.f32 %v221, %v80
    %v223 = vadd.f32 %v222, %v81
    %v224 = vadd.f32 %v223, %v82
    %v225 = vadd.f32 %v224, %v83
    %v226 = vadd.f32 %v225, %v84
    %v227 = vadd.f32 %v226, %v85
    %v228 = vadd.f32 %v227, %v86
    %v229 = vrot.slane %v228, 4
    %v230 = vadd.f32 %v228, %v229
    %v231 = vrot.slane %v230, 2
    %v232 = vadd.f32 %v230, %v231
    %v233 = vrot.slane %v232, 1
    %v234 = vadd.f32 %v232, %v233
    %v235 = vadd.f32 %v87, %v88
    %v236 = vadd.f32 %v235, %v89
    %v237 = vadd.f32 %v236, %v90
    %v238 = vadd.f32 %v237, %v91
    %v239 = vadd.f32 %v238, %v92
    %v240 = vadd.f32 %v239, %v93
    %v241 = vadd.f32 %v240, %v94
    %v242 = vadd.f32 %v241, %v95
    %v243 = vadd.f32 %v242, %v96
    %v244 = vadd.f32 %v243, %v97
    %v245 = vadd.f32 %v244, %v98
    %v246 = vadd.f32 %v245, %v99
    %v247 = vadd.f32 %v246, %v100
    %v248 = vadd.f32 %v247, %v101
    %v249 = vadd.f32 %v248, %v102
    %v250 = vrot.slane %v249, 4
    %v251 = vadd.f32 %v249, %v250
    %v252 = vrot.slane %v251, 2
    %v253 = vadd.f32 %v251, %v252
    %v254 = vrot.slane %v253, 1
    %v255 = vadd.f32 %v253, %v254
    %v256 = vadd.f32 %v103, %v104
    %v257 = vadd.f32 %v256, %v105
    %v258 = vadd.f32 %v257, %v106
    %v259 = vadd.f32 %v258, %v107
    %v260 = vadd.f32 %v259, %v108
    %v261 = vadd.f32 %v260, %v109
    %v262 = vadd.f32 %v261, %v110
    %v263 = vadd.f32 %v262, %v111
    %v264 = vadd.f32 %v263, %v112
    %v265 = vadd.f32 %v264, %v113
    %v266 = vadd.f32 %v265, %v114
    %v267 = vadd.f32 %v266, %v115
    %v268 = vadd.f32 %v267, %v116
    %v269 = vadd.f32 %v268, %v117
    %v270 = vadd.f32 %v269, %v118
    %v271 = vrot.slane %v270, 4
    %v272 = vadd.f32 %v270, %v271
    %v273 = vrot.slane %v272, 2
    %v274 = vadd.f32 %v272, %v273
    %v275 = vrot.slane %v274, 1
    %v276 = vadd.f32 %v274, %v275
    %v277 = vadd.f32 %v119, %v120
    %v278 = vadd.f32 %v277, %v121
    %v279 = vadd.f32 %v278, %v122
    %v280 = vadd.f32 %v279, %v123
    %v281 = vadd.f32 %v280, %v124
    %v282 = vadd.f32 %v281, %v125
    %v283 = vadd.f32 %v282, %v126
    %v284 = vadd.f32 %v283, %v127
    %v285 = vadd.f32 %v284, %v128
    %v286 = vadd.f32 %v285, %v129
    %v287 = vadd.f32 %v286, %v130
    %v288 = vadd.f32 %v287, %v131
    %v289 = vadd.f32 %v288, %v132
    %v290 = vadd.f32 %v289, %v133
    %v291 = vadd.f32 %v290, %v134
    %v292 = vrot.slane %v291, 4
    %v293 = vadd.f32 %v291, %v292
    %v294 = vrot.slane %v293, 2
    %v295 = vadd.f32 %v293, %v294
    %v296 = vrot.slane %v295, 1
    %v297 = vadd.f32 %v295, %v296
    %v298 = vadd.f32 %v135, %v136
    %v299 = vadd.f32 %v298, %v137
    %v300 = vadd.f32 %v299, %v138
    %v301 = vadd.f32 %v300, %v139
    %v302 = vadd.f32 %v301, %v140
    %v303 = vadd.f32 %v302, %v141
    %v304 = vadd.f32 %v303, %v142
    %v305 = vadd.f32 %v304, %v143
    %v306 = vadd.f32 %v305, %v144
    %v307 = vadd.f32 %v306, %v145
    %v308 = vadd.f32 %v307, %v146
    %v309 = vadd.f32 %v308, %v147
    %v310 = vadd.f32 %v309, %v148
    %v311 = vadd.f32 %v310, %v149
    %v312 = vadd.f32 %v311, %v150
    %v313 = vrot.slane %v312, 4
    %v314 = vadd.f32 %v312, %v313
    %v315 = vrot.slane %v314, 2
    %v316 = vadd.f32 %v314, %v315
    %v317 = vrot.slane %v316, 1
    %v318 = vadd.f32 %v316, %v317
    %v319 = vrcp.pop 128.0
    %v320 = vmul.f32 %v171, %v319
    %v321 = vmul.f32 %v192, %v319
    %v322 = vmul.f32 %v213, %v319
    %v323 = vmul.f32 %v234, %v319
    %v324 = vmul.f32 %v255, %v319
    %v325 = vmul.f32 %v276, %v319
    %v326 = vmul.f32 %v297, %v319
    %v327 = vmul.f32 %v318, %v319
    %vm336 = vcmask 1041409
    %v337 = vsel %vm336, %v321, %v320
    %vm338 = vcmask 1042434
    %v339 = vsel %vm338, %v322, %v337
    %vm340 = vcmask 1043459
    %v341 = vsel %vm340, %v323, %v339
    %vm342 = vcmask 1044484
    %v343 = vsel %vm342, %v324, %v341
    %vm344 = vcmask 1045509
    %v345 = vsel %vm344, %v325, %v343
    %vm346 = vcmask 1046534
    %v347 = vsel %vm346, %v326, %v345
    %vm348 = vcmask 1047559
    %v349 = vsel %vm348, %v327, %v347
    %351 = vst [vmem:[#allocation5] sm:$0xff] %v349
    // Predicated region
    $region10: #{tpu_custom_call.1} parent=1 // pred_check
      _
    $region11: #{tpu_custom_call.1} parent=1 // pred_check_branch
      %353 = sbr.rel (0) target = $region13
    $region12: #{tpu_custom_call.1} parent=1 // pred_region
      %s355 = ssub.s32 128, 128
      %356 = vsyncadd [#allocation4], %s355
      %s358 = sshll.u32 [#allocation5], 4
      %s359 = int_to_ptr.vmem [resolvable:$true] %s358
      %361 = dma.vmem_to_hbm [thread:$0]  %s359, 128, %s1, [#allocation4]
    $region13: #{tpu_custom_call.1} parent=1 // pred_fallthru
      _
    // Predicated region
    $region14: #{tpu_custom_call.1} parent=1 // pred_check
      _
    $region15: #{tpu_custom_call.1} parent=1 // pred_check_branch
      %363 = sbr.rel (0) target = $region17
    $region16: #{tpu_custom_call.1} parent=1 // pred_region
      %364 = dma.done [#allocation4], 128
    $region17: #{tpu_custom_call.1} parent=1 // pred_fallthru
      _
    %365 = vsyncpa [#allocation3], 1
    %366 = vsyncpa [#allocation4], 1

</llo_original>
